<compile_context>
chip_gen: v5e
topology: v5e:2x2
jax: 0.10.0
libtpu: 0.0.40
codegen_flags: <defaults>
</compile_context>

<pallas_src>
import jax
import jax.numpy as jnp
from jax.experimental import pallas as pl
from jax.experimental.pallas import tpu as pltpu

H1 = 256        # fc1 output width (fixed by the module spec)
H2 = 128        # fc2 output width (fixed by the module spec)
LANE = 128      # TPU lane width; action dim is padded to this
SUB = 8         # sublane granularity
TB_CAP = 4096   # batch-tile cap: keeps per-step VMEM inside v5e's 16 MiB default


def _round_up(x, m):
    return (x + m - 1) // m * m


def _cdiv(a, b):
    return -(-a // b)


def _tensorcores_per_chip():
    """2 TensorCores per chip on v7x, 1 on v5e/v6e; safe default is 1."""
    try:
        kind = jax.devices()[0].device_kind.lower().replace(" ", "")
    except Exception:
        return 1
    return 2 if ("v7" in kind or "tpu7" in kind) else 1


def _choose_tiling(B, num_cores):
    """Minimum-step tiling: 1 grid step on v5e/v6e, one step per TC on v7x.

    Batch padding is derived from the step count (not a fixed tile), so
    awkward batch sizes waste at most SUB-1 rows of compute.
    """
    B8 = _round_up(max(B, 1), SUB)
    steps = 1
    if num_cores > 1 and B8 >= num_cores * SUB:
        steps = num_cores
    steps = max(steps, _cdiv(B8, TB_CAP))
    TB = _round_up(_cdiv(B8, steps), SUB)
    steps = _cdiv(B8, TB)
    return TB, steps, TB * steps


def actor_kernel(x_ref, w1_ref, w23_ref, b_ref, o_ref):
    """Fused 3-layer MLP on one batch tile.

    x_ref   : (TB, S_pad) f32      state tile (cast to compute dtype in-kernel)
    w1_ref  : (S_pad, 256)         compute dtype (bf16 default, f32 optional)
    w23_ref : (256 + 128, 128)     compute dtype; rows [0:256]=w2, [256:384]=w3 (lane-padded)
    b_ref   : (8, 256+128+128) f32 fused biases replicated over 8 sublanes
    o_ref   : (TB, 128) f32        lane-dense output; padded lanes hold tanh(0)=0
    """
    f32 = jnp.float32
    cdt = w1_ref.dtype

    # Hoisted bias slices (b1 | b2 | b3 packed along lanes, row 0 of the 8x replica).
    b1 = b_ref[0:1, :H1]
    b2 = b_ref[0:1, H1:H1 + H2]
    b3 = b_ref[0:1, H1 + H2:]

    # Layer 1: MXU matmul with f32 accumulation; bias/relu on the VPU in f32.
    x = x_ref[...].astype(cdt)
    h1 = jnp.dot(x, w1_ref[...], preferred_element_type=f32) + b1
    h1 = jnp.maximum(h1, 0.0)

    # Layer 2 (w2 = top 256 rows of the packed buffer; tile-aligned slice).
    w2 = w23_ref[:H1, :]
    h2 = jnp.dot(h1.astype(cdt), w2, preferred_element_type=f32) + b2
    h2 = jnp.maximum(h2, 0.0)

    # Layer 3 (w3 = bottom 128 rows, lane-padded to 128 output columns).
    w3 = w23_ref[H1:, :]
    h3 = jnp.dot(h2.astype(cdt), w3, preferred_element_type=f32) + b3
    o_ref[...] = jnp.tanh(h3)


def init_actor_params(key, state_size, action_size):
    """Matches nn.Linear default init U(-1/sqrt(fan_in), +1/sqrt(fan_in)).
    Weights stored as (in_features, out_features) = PyTorch weight.T."""
    def linear(key, fan_in, fan_out):
        kw, kb = jax.random.split(key)
        bound = 1.0 / jnp.sqrt(jnp.float32(fan_in))
        w = jax.random.uniform(kw, (fan_in, fan_out), jnp.float32, -bound, bound)
        b = jax.random.uniform(kb, (1, fan_out), jnp.float32, -bound, bound)
        return w, b

    k1, k2, k3 = jax.random.split(key, 3)
    w1, b1 = linear(k1, state_size, H1)
    w2, b2 = linear(k2, H1, H2)
    w3, b3 = linear(k3, H2, action_size)
    return {"w1": w1, "b1": b1, "w2": w2, "b2": b2, "w3": w3, "b3": b3}


def pack_actor_params(params, compute_dtype=jnp.bfloat16):
    """Pack 6 per-layer tensors into 3 kernel operands (once, off the hot path).

    compute_dtype=bfloat16 (default) is the native MXU path on all of
    v5e/v6e/v7x: half the weight DMA bytes, bf16 MXU, f32 accumulation;
    biases always stay f32.  Pass jnp.float32 for strict-parity mode.
    """
    w1, b1 = params["w1"], params["b1"]
    w2, b2 = params["w2"], params["b2"]
    w3, b3 = params["w3"], params["b3"]

    S = w1.shape[0]
    A = w3.shape[1]
    S_pad = _round_up(max(S, 1), SUB)
    A_pad = LANE

    # w1: pad the contraction dim up to a sublane multiple (zeros are inert).
    w1p = jnp.zeros((S_pad, H1), compute_dtype).at[:S, :].set(w1.astype(compute_dtype))

    # w3: pad the output (lane) dim to 128 so the final store is lane-dense.
    w3p = jnp.zeros((H2, A_pad), compute_dtype).at[:, :A].set(w3.astype(compute_dtype))

    # Fuse w2 (256,128) and padded w3 (128,128) along sublanes -> (384,128), zero waste.
    w23 = jnp.concatenate([w2.astype(compute_dtype), w3p], axis=0)

    # Fuse biases along the lane axis and replicate to 8 sublanes -> (8, 512) f32,
    # so the bias block is a full (8,128)-aligned tile (unmasked loads).
    b3p = jnp.zeros((1, A_pad), jnp.float32).at[:, :A].set(b3.astype(jnp.float32))
    b_row = jnp.concatenate([b1.astype(jnp.float32), b2.astype(jnp.float32), b3p], axis=1)
    b = jnp.tile(b_row, (SUB, 1))

    return {"w1p": w1p, "w23": w23, "b": b, "state_size": S, "action_size": A}


def actor_forward(state, packed):
    """state: (B, state_size) f32. Returns (B, action_size) f32 actions in [-1, 1]."""
    S = packed["state_size"]
    A = packed["action_size"]
    w1p, w23, b = packed["w1p"], packed["w23"], packed["b"]
    S_pad = w1p.shape[0]
    A_pad = w23.shape[1]

    B = state.shape[0]
    TB, steps, B_pad = _choose_tiling(B, _tensorcores_per_chip())

    # Hot-path friendly: skip the wrapper zero-pad entirely when shapes already line up.
    if B_pad == B and S_pad == S:
        x = state
    else:
        x = jnp.zeros((B_pad, S_pad), state.dtype).at[:B, :S].set(state)

    out = pl.pallas_call(
        actor_kernel,
        out_shape=jax.ShapeDtypeStruct((B_pad, A_pad), jnp.float32),
        grid=(steps,),
        in_specs=[
            pl.BlockSpec((TB, S_pad), lambda i: (i, 0)),     # batch-tiled activations
            pl.BlockSpec(w1p.shape, lambda i: (0, 0)),       # weights: constant block index
            pl.BlockSpec(w23.shape, lambda i: (0, 0)),       #   -> resident across steps
            pl.BlockSpec(b.shape, lambda i: (0, 0)),
        ],
        out_specs=pl.BlockSpec((TB, A_pad), lambda i: (i, 0)),
        compiler_params=pltpu.CompilerParams(
            dimension_semantics=("parallel",),               # one step per TC on v7x
        ),
    )(x, w1p, w23, b)

    # Strip batch / lane padding once, outside the kernel.
    return out[:B, :A]


def actor_reference(state, params):
    h1 = jnp.maximum(state @ params["w1"] + params["b1"], 0.0)
    h2 = jnp.maximum(h1 @ params["w2"] + params["b2"], 0.0)
    return jnp.tanh(h2 @ params["w3"] + params["b3"])


if __name__ == "__main__":
    key = jax.random.PRNGKey(0)
    k_state, k_params = jax.random.split(key)

    batch = 2
    state_size = 8
    action_size = 4

    state = jax.random.normal(k_state, (batch, state_size), jnp.float32)
    params = init_actor_params(k_params, state_size, action_size)
    ref = actor_reference(state, params)

    # 1) Default bf16 fast path (native MXU dtype on v5e/v6e/v7x, f32 accumulate).
    #    Input is cast to bf16 in-kernel, so this is input+weight quantization.
    packed_bf16 = pack_actor_params(params)
    out_bf16 = jax.block_until_ready(actor_forward(state, packed_bf16))
    assert out_bf16.shape == (batch, action_size), out_bf16.shape
    assert jnp.allclose(out_bf16, ref, atol=3e-2, rtol=3e-2), "bf16 path diverged beyond tolerance"

    # 2) f32 strict-parity path (MXU f32 emulation; matches pure-f32 to ~1e-5).
    packed_f32 = pack_actor_params(params, jnp.float32)
    out_f32 = jax.block_until_ready(actor_forward(state, packed_f32))
    assert out_f32.shape == (batch, action_size), out_f32.shape
    assert jnp.allclose(out_f32, ref, atol=1e-5, rtol=1e-5), "f32 mismatch vs pure-JAX reference"

    # 3) Training-sized batch: grid collapses to 1 step (v5e/v6e) or 2 (v7x),
    #    weights resident, no wrapper padding (B already step-aligned).
    big_B = 1024
    big_state = jax.random.normal(k_state, (big_B, state_size), jnp.float32)
    ref_big = actor_reference(big_state, params)
    out_big = jax.block_until_ready(actor_forward(big_state, packed_f32))
    assert out_big.shape == (big_B, action_size), out_big.shape
    assert jnp.allclose(out_big, ref_big, atol=1e-5, rtol=1e-5), "batched-grid mismatch (f32)"
    out_big_bf16 = jax.block_until_ready(actor_forward(big_state, packed_bf16))
    assert jnp.allclose(out_big_bf16, ref_big, atol=3e-2, rtol=3e-2), "batched-grid mismatch (bf16)"

    print("KERNEL_OK")
</pallas_src>

<mosaic_0001>
module attributes {stable_mosaic.version = 11 : i64} {
  func.func @actor_kernel(%arg0: i32, %arg1: memref<8x8xf32, #tpu.memory_space<vmem>>, %arg2: memref<8x256xbf16, #tpu.memory_space<vmem>>, %arg3: memref<384x128xbf16, #tpu.memory_space<vmem>>, %arg4: memref<8x512xf32, #tpu.memory_space<vmem>>, %arg5: memref<8x128xf32, #tpu.memory_space<vmem>>) attributes {dimension_semantics = [#tpu.dimension_semantics<parallel>], iteration_bounds = array<i64: 1>, scalar_prefetch = 0 : i64, scratch_operands = 0 : i64, tpu.core_type = #tpu.core_type<tc>, window_params = [{transform_indices = @transform_0, window_bounds = array<i64: 8, 8>}, {pipeline_mode = #tpu.pipeline_mode<synchronous>, transform_indices = @transform_1, window_bounds = array<i64: 8, 256>}, {pipeline_mode = #tpu.pipeline_mode<synchronous>, transform_indices = @transform_2, window_bounds = array<i64: 384, 128>}, {pipeline_mode = #tpu.pipeline_mode<synchronous>, transform_indices = @transform_3, window_bounds = array<i64: 8, 512>}, {transform_indices = @transform_4, window_bounds = array<i64: 8, 128>}]} {
    %c0 = arith.constant 0 : index
    %c0_0 = arith.constant 0 : index
    %0 = vector.load %arg4[%c0, %c0_0] : memref<8x512xf32, #tpu.memory_space<vmem>>, vector<1x256xf32>
    %c0_1 = arith.constant 0 : index
    %c256 = arith.constant 256 : index
    %1 = vector.load %arg4[%c0_1, %c256] : memref<8x512xf32, #tpu.memory_space<vmem>>, vector<1x128xf32>
    %c0_2 = arith.constant 0 : index
    %c384 = arith.constant 384 : index
    %2 = vector.load %arg4[%c0_2, %c384] : memref<8x512xf32, #tpu.memory_space<vmem>>, vector<1x128xf32>
    %c0_3 = arith.constant 0 : index
    %c0_4 = arith.constant 0 : index
    %3 = vector.load %arg1[%c0_3, %c0_4] : memref<8x8xf32, #tpu.memory_space<vmem>>, vector<8x8xf32>
    %4 = arith.truncf %3 : vector<8x8xf32> to vector<8x8xbf16>
    %c0_5 = arith.constant 0 : index
    %c0_6 = arith.constant 0 : index
    %5 = vector.load %arg2[%c0_5, %c0_6] : memref<8x256xbf16, #tpu.memory_space<vmem>>, vector<8x256xbf16>
    %cst = arith.constant dense<0.000000e+00> : vector<8x256xf32>
    %6 = tpu.matmul %4, %5, %cst {dimension_numbers = #tpu.dot_dimension_numbers<[1], [0], [0], [1], [0, 0, 1, 1], [], []>} : vector<8x8xbf16>, vector<8x256xbf16>, vector<8x256xf32> -> vector<8x256xf32>
    %7 = vector.broadcast %0 : vector<1x256xf32> to vector<8x256xf32>
    %8 = arith.addf %6, %7 : vector<8x256xf32>
    %cst_7 = arith.constant 0.000000e+00 : f32
    %9 = vector.broadcast %cst_7 : f32 to vector<8x256xf32>
    %10 = arith.maximumf %8, %9 : vector<8x256xf32>
    %c0_8 = arith.constant 0 : index
    %c0_9 = arith.constant 0 : index
    %11 = vector.load %arg3[%c0_8, %c0_9] : memref<384x128xbf16, #tpu.memory_space<vmem>>, vector<256x128xbf16>
    %12 = arith.truncf %10 : vector<8x256xf32> to vector<8x256xbf16>
    %cst_10 = arith.constant dense<0.000000e+00> : vector<8x128xf32>
    %13 = tpu.matmul %12, %11, %cst_10 {dimension_numbers = #tpu.dot_dimension_numbers<[1], [0], [0], [1], [0, 0, 1, 1], [], []>} : vector<8x256xbf16>, vector<256x128xbf16>, vector<8x128xf32> -> vector<8x128xf32>
    %14 = vector.broadcast %1 : vector<1x128xf32> to vector<8x128xf32>
    %15 = arith.addf %13, %14 : vector<8x128xf32>
    %cst_11 = arith.constant 0.000000e+00 : f32
    %16 = vector.broadcast %cst_11 : f32 to vector<8x128xf32>
    %17 = arith.maximumf %15, %16 : vector<8x128xf32>
    %c256_12 = arith.constant 256 : index
    %c0_13 = arith.constant 0 : index
    %18 = vector.load %arg3[%c256_12, %c0_13] : memref<384x128xbf16, #tpu.memory_space<vmem>>, vector<128x128xbf16>
    %19 = arith.truncf %17 : vector<8x128xf32> to vector<8x128xbf16>
    %cst_14 = arith.constant dense<0.000000e+00> : vector<8x128xf32>
    %20 = tpu.matmul %19, %18, %cst_14 {dimension_numbers = #tpu.dot_dimension_numbers<[1], [0], [0], [1], [0, 0, 1, 1], [], []>} : vector<8x128xbf16>, vector<128x128xbf16>, vector<8x128xf32> -> vector<8x128xf32>
    %21 = vector.broadcast %2 : vector<1x128xf32> to vector<8x128xf32>
    %22 = arith.addf %20, %21 : vector<8x128xf32>
    %23 = math.tanh %22 : vector<8x128xf32>
    %c0_15 = arith.constant 0 : index
    %c0_16 = arith.constant 0 : index
    %24 = vector.load %arg5[%c0_15, %c0_16] : memref<8x128xf32, #tpu.memory_space<vmem>>, vector<8x128xf32>
    tpu.vector_store %arg5[%c0_15, %c0_16], %23 {strides = array<i32>} : memref<8x128xf32, #tpu.memory_space<vmem>>, vector<8x128xf32>,
    return
  }
  func.func @transform_0(%arg0: i32) -> (i32, i32) {
    %c0_i32 = arith.constant 0 : i32
    %c0_i32_0 = arith.constant 0 : i32
    return %arg0, %c0_i32 : i32, i32
  }
  func.func @transform_1(%arg0: i32) -> (i32, i32) {
    %c0_i32 = arith.constant 0 : i32
    %c0_i32_0 = arith.constant 0 : i32
    %c0_i32_1 = arith.constant 0 : i32
    return %c0_i32, %c0_i32_0 : i32, i32
  }
  func.func @transform_2(%arg0: i32) -> (i32, i32) {
    %c0_i32 = arith.constant 0 : i32
    %c0_i32_0 = arith.constant 0 : i32
    %c0_i32_1 = arith.constant 0 : i32
    return %c0_i32, %c0_i32_0 : i32, i32
  }
  func.func @transform_3(%arg0: i32) -> (i32, i32) {
    %c0_i32 = arith.constant 0 : i32
    %c0_i32_0 = arith.constant 0 : i32
    %c0_i32_1 = arith.constant 0 : i32
    return %c0_i32, %c0_i32_0 : i32, i32
  }
  func.func @transform_4(%arg0: i32) -> (i32, i32) {
    %c0_i32 = arith.constant 0 : i32
    %c0_i32_0 = arith.constant 0 : i32
    return %arg0, %c0_i32 : i32, i32
  }
}

</mosaic_0001>

<llo_original>
// kernel: tpu_custom_call.1
$region0: #{tpu_custom_call.1}
  #allocation0 [shape = 'u32[]', space=smem, size = 0x4, offset = 0x4, fixed_abs, tag = 'smem constant byte address 0x4 - core index']
  #allocation1 [shape = 'u32[72,128]{1,0:T(1,128)}', space=vmem, size = 0x9000, scoped, tag = 'internal scratch']
  %s0 = inlined_call_operand.hbm [shape: f32[8,8], index: 0, kind: input, shape index: {}]
  %s1 = inlined_call_operand.hbm [shape: bf16[8,256], index: 1, kind: input, shape index: {}]
  %s2 = inlined_call_operand.hbm [shape: bf16[384,128], index: 2, kind: input, shape index: {}]
  %s3 = inlined_call_operand.hbm [shape: f32[8,512], index: 3, kind: input, shape index: {}]
  %s4 = inlined_call_operand.hbm [shape: f32[8,128], index: 4, kind: output, shape index: {}]
  %s5 = sld [smem:[#allocation0]]
  $region42: #{tpu_custom_call.1} parent=0
    _
  %s7 = ssub.s32 1, %s5
  %s8 = scalar_select 0, %s7, %s5
  $region1: #{tpu_custom_call.1} parent=0
    #allocation2 [shape = 'u8[4096]{0}', space=vmem, size = 0x1000, scoped, tag = 'input window, operand 0, single buffered']
    #allocation3 [shape = 's32[1]{0}', space=sflag, size = 0x4, scoped, tag = 'scoped memory for tpu_custom_call.1']
    #allocation4 [shape = 's32[1]{0}', space=sflag, size = 0x4, scoped, tag = 'scoped memory for tpu_custom_call.1']
    #allocation5 [shape = 'u8[4096]{0}', space=vmem, size = 0x1000, scoped, tag = 'input window, operand 1, single buffered']
    #allocation6 [shape = 's32[1]{0}', space=sflag, size = 0x4, scoped, tag = 'scoped memory for tpu_custom_call.1']
    #allocation7 [shape = 'u8[98304]{0}', space=vmem, size = 0x18000, scoped, tag = 'input window, operand 2, single buffered']
    #allocation8 [shape = 'u8[16384]{0}', space=vmem, size = 0x4000, scoped, tag = 'input window, operand 3, single buffered']
    #allocation9 [shape = 's32[1]{0}', space=sflag, size = 0x4, scoped, tag = 'scoped memory for tpu_custom_call.1']
    #allocation10 [shape = 'u8[4096]{0}', space=vmem, size = 0x1000, scoped, tag = 'output window, operand 0, single buffered']
    %9 = vsyncpa [#allocation3], 0
    %10 = vsyncpa [#allocation6], 0
    %11 = vsyncpa [#allocation9], 0
    %12 = vsyncpa [#allocation4], 0
    // Predicated region
    $region2: #{tpu_custom_call.1} parent=1 // pred_check
      _
    $region3: #{tpu_custom_call.1} parent=1 // pred_check_branch
      %14 = sbr.rel (0) target = $region5
    $region4: #{tpu_custom_call.1} parent=1 // pred_region
      %16 = vsyncadd [#allocation3], 0
      %s18 = sshll.u32 %s0, 4
      %s19 = int_to_ptr.hbm [resolvable:$true] %s18
      %s20 = sshll.u32 [#allocation2], 4
      %s21 = int_to_ptr.vmem [resolvable:$true] %s20
      %23 = dma.hbm_to_vmem [thread:$0]  %s19, 128, %s21, [#allocation3]
    $region5: #{tpu_custom_call.1} parent=1 // pred_fallthru
      _
    // Predicated region
    $region6: #{tpu_custom_call.1} parent=1 // pred_check
      _
    $region7: #{tpu_custom_call.1} parent=1 // pred_check_branch
      %25 = sbr.rel (0) target = $region9
    $region8: #{tpu_custom_call.1} parent=1 // pred_region
      %27 = vsyncadd [#allocation6], 0
      %s29 = sshll.u32 %s1, 4
      %s30 = int_to_ptr.hbm [resolvable:$true] %s29
      %s31 = sshll.u32 [#allocation5], 4
      %s32 = int_to_ptr.vmem [resolvable:$true] %s31
      %34 = dma.hbm_to_vmem [thread:$0]  %s30, 128, %s32, [#allocation6]
    $region9: #{tpu_custom_call.1} parent=1 // pred_fallthru
      _
    // Predicated region
    $region10: #{tpu_custom_call.1} parent=1 // pred_check
      _
    $region11: #{tpu_custom_call.1} parent=1 // pred_check_branch
      %36 = sbr.rel (0) target = $region13
    $region12: #{tpu_custom_call.1} parent=1 // pred_region
      %38 = vsyncadd [#allocation6], 0
      %s39 = sshll.u32 %s2, 4
      %s40 = int_to_ptr.hbm [resolvable:$true] %s39
      %s41 = sshll.u32 [#allocation7], 4
      %s42 = int_to_ptr.vmem [resolvable:$true] %s41
      %47 = dma.hbm_to_vmem [thread:$0]  %s40, 3072, %s42, [#allocation6], 64, 64, 4
    $region13: #{tpu_custom_call.1} parent=1 // pred_fallthru
      _
    // Predicated region
    $region14: #{tpu_custom_call.1} parent=1 // pred_check
      _
    $region15: #{tpu_custom_call.1} parent=1 // pred_check_branch
      %49 = sbr.rel (0) target = $region17
    $region16: #{tpu_custom_call.1} parent=1 // pred_region
      %51 = vsyncadd [#allocation9], 0
      %s53 = sshll.u32 %s3, 4
      %s54 = int_to_ptr.hbm [resolvable:$true] %s53
      %s55 = sshll.u32 [#allocation8], 4
      %s56 = int_to_ptr.vmem [resolvable:$true] %s55
      %58 = dma.hbm_to_vmem [thread:$0]  %s54, 512, %s56, [#allocation9]
    $region17: #{tpu_custom_call.1} parent=1 // pred_fallthru
      _
    // Predicated region
    $region18: #{tpu_custom_call.1} parent=1 // pred_check
      _
    $region19: #{tpu_custom_call.1} parent=1 // pred_check_branch
      %60 = sbr.rel (0) target = $region21
    $region20: #{tpu_custom_call.1} parent=1 // pred_region
      %62 = dma.done [#allocation3], 128
    $region21: #{tpu_custom_call.1} parent=1 // pred_fallthru
      _
    // Predicated region
    $region22: #{tpu_custom_call.1} parent=1 // pred_check
      _
    $region23: #{tpu_custom_call.1} parent=1 // pred_check_branch
      %64 = sbr.rel (0) target = $region25
    $region24: #{tpu_custom_call.1} parent=1 // pred_region
      %66 = dma.done [#allocation6], 128
    $region25: #{tpu_custom_call.1} parent=1 // pred_fallthru
      _
    // Predicated region
    $region26: #{tpu_custom_call.1} parent=1 // pred_check
      _
    $region27: #{tpu_custom_call.1} parent=1 // pred_check_branch
      %68 = sbr.rel (0) target = $region29
    $region28: #{tpu_custom_call.1} parent=1 // pred_region
      %70 = dma.done [#allocation6], 3072
    $region29: #{tpu_custom_call.1} parent=1 // pred_fallthru
      _
    // Predicated region
    $region30: #{tpu_custom_call.1} parent=1 // pred_check
      _
    $region31: #{tpu_custom_call.1} parent=1 // pred_check_branch
      %72 = sbr.rel (0) target = $region33
    $region32: #{tpu_custom_call.1} parent=1 // pred_region
      %74 = dma.done [#allocation9], 512
    $region33: #{tpu_custom_call.1} parent=1 // pred_fallthru
      _
    %v76 = vld [vmem:[#allocation8] ss:$8 sm:$0x3]
    %v77 = vld [vmem:[#allocation8 + $0x10] ss:$0 sm:$0xff]
    %v78 = vld [vmem:[#allocation8 + $0x18] ss:$0 sm:$0xff]
    %v79 = vld [vmem:[#allocation2] sm:$0xff]
    %v80 = vpack.c.bf16 %v79, %v79
    %v81 = vld [vmem:[#allocation5] sm:$0xff]
    %v83 = vperm.slane %v76, 0
    %v84 = vperm.slane %v76, 1
    %v88 = vunpack.c.l.b16 %v81
    %v89 = vunpack.c.h.b16 %v81
    %v90 = vpack.c.b16 %v88, %v88
    %v91 = vpack.c.b16 %v89, %v89
    %vm92 = vcmask 64512
    %v94 = vsel %vm92, %v80, 0
    %vm96 = vcmask 1043456
    %v98 = vsel %vm96, %v90, 0
    %v101 = vsel %vm96, %v91, 0
    %103 = vmatpush.bf16.msra.mxu0 0
    %104 = vmatpush.bf16.msra.mxu0 0
    %105 = vmatpush.bf16.msra.mxu0 0
    %106 = vmatpush.bf16.msra.mxu0 0
    %107 = vmatpush.bf16.msra.mxu0 0
    %108 = vmatpush.bf16.msra.mxu0 0
    %109 = vmatpush.bf16.msra.mxu0 0
    %110 = vmatpush.bf16.msra.mxu0 %v98
    %111 = vmatmul.bf16.gmra.mxu0 %v94
    %v112 = vpop.f32.mrf.mxu0
    %v113 = vadd.f32 %v83, %v112
    %v114 = vpop.f32.mrf.mxu0
    %115 = vdwg.mxu0
    %116 = vmatpush.bf16.msra.mxu0 0
    %117 = vmatpush.bf16.msra.mxu0 0
    %118 = vmatpush.bf16.msra.mxu0 0
    %119 = vmatpush.bf16.msra.mxu0 0
    %120 = vmatpush.bf16.msra.mxu0 0
    %121 = vmatpush.bf16.msra.mxu0 0
    %122 = vmatpush.bf16.msra.mxu0 0
    %123 = vmatpush.bf16.msra.mxu0 %v101
    %124 = vmatmul.bf16.gmra.mxu0 %v94
    %v125 = vpop.f32.mrf.mxu0
    %v126 = vadd.f32 %v84, %v125
    %v127 = vpop.f32.mrf.mxu0
    %128 = vdwg.mxu0
    %v129 = vmax.f32 %v113, 0.0
    %v130 = vmax.f32 %v126, 0.0
    %v131 = vld [vmem:[#allocation7] sm:$0xf]
    %v132 = vld [vmem:[#allocation7 + $0x4] sm:$0xf]
    %v133 = vld [vmem:[#allocation7 + $0x8] sm:$0xf]
    %v134 = vld [vmem:[#allocation7 + $0xc] sm:$0xf]
    %v135 = vld [vmem:[#allocation7 + $0x10] sm:$0xf]
    %v136 = vld [vmem:[#allocation7 + $0x14] sm:$0xf]
    %v137 = vld [vmem:[#allocation7 + $0x18] sm:$0xf]
    %v138 = vld [vmem:[#allocation7 + $0x1c] sm:$0xf]
    %v139 = vld [vmem:[#allocation7 + $0x20] sm:$0xf]
    %v140 = vld [vmem:[#allocation7 + $0x24] sm:$0xf]
    %v141 = vld [vmem:[#allocation7 + $0x28] sm:$0xf]
    %v142 = vld [vmem:[#allocation7 + $0x2c] sm:$0xf]
    %v143 = vld [vmem:[#allocation7 + $0x30] sm:$0xf]
    %v144 = vld [vmem:[#allocation7 + $0x34] sm:$0xf]
    %v145 = vld [vmem:[#allocation7 + $0x38] sm:$0xf]
    %v146 = vld [vmem:[#allocation7 + $0x3c] sm:$0xf]
    %v147 = vld [vmem:[#allocation7 + $0x40] sm:$0xf]
    %v148 = vld [vmem:[#allocation7 + $0x44] sm:$0xf]
    %v149 = vld [vmem:[#allocation7 + $0x48] sm:$0xf]
    %v150 = vld [vmem:[#allocation7 + $0x4c] sm:$0xf]
    %v151 = vld [vmem:[#allocation7 + $0x50] sm:$0xf]
    %v152 = vld [vmem:[#allocation7 + $0x54] sm:$0xf]
    %v153 = vld [vmem:[#allocation7 + $0x58] sm:$0xf]
    %v154 = vld [vmem:[#allocation7 + $0x5c] sm:$0xf]
    %v155 = vld [vmem:[#allocation7 + $0x60] sm:$0xf]
    %v156 = vld [vmem:[#allocation7 + $0x64] sm:$0xf]
    %v157 = vld [vmem:[#allocation7 + $0x68] sm:$0xf]
    %v158 = vld [vmem:[#allocation7 + $0x6c] sm:$0xf]
    %v159 = vld [vmem:[#allocation7 + $0x70] sm:$0xf]
    %v160 = vld [vmem:[#allocation7 + $0x74] sm:$0xf]
    %v161 = vld [vmem:[#allocation7 + $0x78] sm:$0xf]
    %v162 = vld [vmem:[#allocation7 + $0x7c] sm:$0xf]
    %v163 = vpack.c.bf16 %v129, %v129
    %v164 = vpack.c.bf16 %v130, %v130
    %v197 = vunpack.c.l.b16 %v131
    %v198 = vunpack.c.l.b16 %v132
    %v199 = vunpack.c.l.b16 %v133
    %v200 = vunpack.c.l.b16 %v134
    %v201 = vunpack.c.l.b16 %v135
    %v202 = vunpack.c.l.b16 %v136
    %v203 = vunpack.c.l.b16 %v137
    %v204 = vunpack.c.l.b16 %v138
    %v205 = vunpack.c.l.b16 %v139
    %v206 = vunpack.c.l.b16 %v140
    %v207 = vunpack.c.l.b16 %v141
    %v208 = vunpack.c.l.b16 %v142
    %v209 = vunpack.c.l.b16 %v143
    %v210 = vunpack.c.l.b16 %v144
    %v211 = vunpack.c.l.b16 %v145
    %v212 = vunpack.c.l.b16 %v146
    %v213 = vunpack.c.l.b16 %v147
    %v214 = vunpack.c.l.b16 %v148
    %v215 = vunpack.c.l.b16 %v149
    %v216 = vunpack.c.l.b16 %v150
    %v217 = vunpack.c.l.b16 %v151
    %v218 = vunpack.c.l.b16 %v152
    %v219 = vunpack.c.l.b16 %v153
    %v220 = vunpack.c.l.b16 %v154
    %v221 = vunpack.c.l.b16 %v155
    %v222 = vunpack.c.l.b16 %v156
    %v223 = vunpack.c.l.b16 %v157
    %v224 = vunpack.c.l.b16 %v158
    %v225 = vunpack.c.l.b16 %v159
    %v226 = vunpack.c.l.b16 %v160
    %v227 = vunpack.c.l.b16 %v161
    %v228 = vunpack.c.l.b16 %v162
    %v229 = vpack.c.b16 %v198, %v197
    %v230 = vpack.c.b16 %v200, %v199
    %v231 = vpack.c.b16 %v202, %v201
    %v232 = vpack.c.b16 %v204, %v203
    %v233 = vpack.c.b16 %v206, %v205
    %v234 = vpack.c.b16 %v208, %v207
    %v235 = vpack.c.b16 %v210, %v209
    %v236 = vpack.c.b16 %v212, %v211
    %v237 = vpack.c.b16 %v214, %v213
    %v238 = vpack.c.b16 %v216, %v215
    %v239 = vpack.c.b16 %v218, %v217
    %v240 = vpack.c.b16 %v220, %v219
    %v241 = vpack.c.b16 %v222, %v221
    %v242 = vpack.c.b16 %v224, %v223
    %v243 = vpack.c.b16 %v226, %v225
    %v244 = vpack.c.b16 %v228, %v227
    %261 = vmatpush.bf16.msra.mxu0 %v236
    %262 = vmatpush.bf16.msra.mxu0 %v235
    %263 = vmatpush.bf16.msra.mxu0 %v234
    %264 = vmatpush.bf16.msra.mxu0 %v233
    %265 = vmatpush.bf16.msra.mxu0 %v232
    %266 = vmatpush.bf16.msra.mxu0 %v231
    %267 = vmatpush.bf16.msra.mxu0 %v230
    %268 = vmatpush.bf16.msra.mxu0 %v229
    %269 = vmatmul.bf16.gmra.mxu0 %v163
    %v270 = vpop.f32.mrf.mxu0
    %v271 = vadd.f32 %v77, %v270
    %v272 = vpop.f32.mrf.mxu0
    %273 = vdwg.mxu0
    %274 = vmatpush.bf16.msra.mxu0 %v244
    %275 = vmatpush.bf16.msra.mxu0 %v243
    %276 = vmatpush.bf16.msra.mxu0 %v242
    %277 = vmatpush.bf16.msra.mxu0 %v241
    %278 = vmatpush.bf16.msra.mxu0 %v240
    %279 = vmatpush.bf16.msra.mxu0 %v239
    %280 = vmatpush.bf16.msra.mxu0 %v238
    %281 = vmatpush.bf16.msra.mxu0 %v237
    %282 = vmatmul.bf16.gmra.mxu0 %v164
    %v283 = vpop.f32.mrf.mxu0
    %v284 = vadd.f32 %v271, %v283
    %v285 = vpop.f32.mrf.mxu0
    %286 = vdwg.mxu0
    %v287 = vmax.f32 %v284, 0.0
    %v288 = vld [vmem:[#allocation7 + $0x80] sm:$0xf]
    %v289 = vld [vmem:[#allocation7 + $0x84] sm:$0xf]
    %v290 = vld [vmem:[#allocation7 + $0x88] sm:$0xf]
    %v291 = vld [vmem:[#allocation7 + $0x8c] sm:$0xf]
    %v292 = vld [vmem:[#allocation7 + $0x90] sm:$0xf]
    %v293 = vld [vmem:[#allocation7 + $0x94] sm:$0xf]
    %v294 = vld [vmem:[#allocation7 + $0x98] sm:$0xf]
    %v295 = vld [vmem:[#allocation7 + $0x9c] sm:$0xf]
    %v296 = vld [vmem:[#allocation7 + $0xa0] sm:$0xf]
    %v297 = vld [vmem:[#allocation7 + $0xa4] sm:$0xf]
    %v298 = vld [vmem:[#allocation7 + $0xa8] sm:$0xf]
    %v299 = vld [vmem:[#allocation7 + $0xac] sm:$0xf]
    %v300 = vld [vmem:[#allocation7 + $0xb0] sm:$0xf]
    %v301 = vld [vmem:[#allocation7 + $0xb4] sm:$0xf]
    %v302 = vld [vmem:[#allocation7 + $0xb8] sm:$0xf]
    %v303 = vld [vmem:[#allocation7 + $0xbc] sm:$0xf]
    %v304 = vpack.c.bf16 %v287, %v287
    %v321 = vunpack.c.l.b16 %v288
    %v322 = vunpack.c.l.b16 %v289
    %v323 = vunpack.c.l.b16 %v290
    %v324 = vunpack.c.l.b16 %v291
    %v325 = vunpack.c.l.b16 %v292
    %v326 = vunpack.c.l.b16 %v293
    %v327 = vunpack.c.l.b16 %v294
    %v328 = vunpack.c.l.b16 %v295
    %v329 = vunpack.c.l.b16 %v296
    %v330 = vunpack.c.l.b16 %v297
    %v331 = vunpack.c.l.b16 %v298
    %v332 = vunpack.c.l.b16 %v299
    %v333 = vunpack.c.l.b16 %v300
    %v334 = vunpack.c.l.b16 %v301
    %v335 = vunpack.c.l.b16 %v302
    %v336 = vunpack.c.l.b16 %v303
    %v337 = vpack.c.b16 %v322, %v321
    %v338 = vpack.c.b16 %v324, %v323
    %v339 = vpack.c.b16 %v326, %v325
    %v340 = vpack.c.b16 %v328, %v327
    %v341 = vpack.c.b16 %v330, %v329
    %v342 = vpack.c.b16 %v332, %v331
    %v343 = vpack.c.b16 %v334, %v333
    %v344 = vpack.c.b16 %v336, %v335
    %353 = vmatpush.bf16.msra.mxu0 %v344
    %354 = vmatpush.bf16.msra.mxu0 %v343
    %355 = vmatpush.bf16.msra.mxu0 %v342
    %356 = vmatpush.bf16.msra.mxu0 %v341
    %357 = vmatpush.bf16.msra.mxu0 %v340
    %358 = vmatpush.bf16.msra.mxu0 %v339
    %359 = vmatpush.bf16.msra.mxu0 %v338
    %360 = vmatpush.bf16.msra.mxu0 %v337
    %361 = vmatmul.bf16.gmra.mxu0 %v304
    %v362 = vpop.f32.mrf.mxu0
    %v363 = vadd.f32 %v78, %v362
    %v364 = vpop.f32.mrf.mxu0
    %365 = vdwg.mxu0
    %v366 = vtanh.pop %v363
    %367 = vst [vmem:[#allocation10] sm:$0xff] %v366
    // Predicated region
    $region34: #{tpu_custom_call.1} parent=1 // pred_check
      _
    $region35: #{tpu_custom_call.1} parent=1 // pred_check_branch
      %369 = sbr.rel (0) target = $region37
    $region36: #{tpu_custom_call.1} parent=1 // pred_region
      %371 = vsyncadd [#allocation4], 0
      %s373 = sshll.u32 [#allocation10], 4
      %s374 = int_to_ptr.vmem [resolvable:$true] %s373
      %s375 = sshll.u32 %s4, 4
      %s376 = int_to_ptr.hbm [resolvable:$true] %s375
      %378 = dma.vmem_to_hbm [thread:$0]  %s374, 128, %s376, [#allocation4]
    $region37: #{tpu_custom_call.1} parent=1 // pred_fallthru
      _
    // Predicated region
    $region38: #{tpu_custom_call.1} parent=1 // pred_check
      _
    $region39: #{tpu_custom_call.1} parent=1 // pred_check_branch
      %380 = sbr.rel (0) target = $region41
    $region40: #{tpu_custom_call.1} parent=1 // pred_region
      %382 = dma.done [#allocation4], 128
    $region41: #{tpu_custom_call.1} parent=1 // pred_fallthru
      _
    %383 = vsyncpa [#allocation3], 1
    %384 = vsyncpa [#allocation6], 1
    %385 = vsyncpa [#allocation9], 1
    %386 = vsyncpa [#allocation4], 1

</llo_original>
